<compile_context>
chip_gen: v5e
topology: v5e:2x2
jax: 0.10.0
libtpu: 0.0.40
codegen_flags: <defaults>
</compile_context>

<pallas_src>
import functools

import jax
import jax.numpy as jnp
from jax.experimental import pallas as pl
from jax.experimental.pallas import tpu as pltpu


def _round_up(x: int, m: int) -> int:
    return ((x + m - 1) // m) * m


def linear_kernel(x_ref, w_ref, b_ref, o_ref, acc_ref):
    """One (tm, tn) output tile, accumulated over the K grid axis."""
    k = pl.program_id(2)

    @pl.when(k == 0)
    def _():
        acc_ref[...] = jnp.zeros_like(acc_ref)

    # bf16 x bf16 -> f32 accumulate on the MXU.
    acc_ref[...] += jnp.dot(
        x_ref[...], w_ref[...], preferred_element_type=jnp.float32
    )

    @pl.when(k == pl.num_programs(2) - 1)
    def _():
        # Bias add happens once per output tile, in f32 on the accumulator.
        o_ref[...] = (acc_ref[...] + b_ref[...]).astype(o_ref.dtype)


@functools.partial(jax.jit, static_argnames=("tm", "tn", "tk", "compute_dtype"))
def simple_model_forward(
    x, w, b, *, tm=128, tn=128, tk=256, compute_dtype=jnp.bfloat16
):
    """x: (B, D_in), w: (D_in, D_out), b: (D_out,) or (1, D_out) -> (B, D_out)."""
    B, D_in = x.shape
    D_out = w.shape[1]
    b2 = b.reshape(1, D_out)

    # Pad every axis up to its tile size (zero padding keeps the math exact;
    # padded rows/cols are sliced off at the end).
    Bp = _round_up(B, tm)
    Kp = _round_up(D_in, tk)
    Np = _round_up(D_out, tn)

    xp = jnp.pad(x, ((0, Bp - B), (0, Kp - D_in))).astype(compute_dtype)
    wp = jnp.pad(w, ((0, Kp - D_in), (0, Np - D_out))).astype(compute_dtype)
    bp = jnp.pad(b2, ((0, 0), (0, Np - D_out))).astype(jnp.float32)

    grid = (Bp // tm, Np // tn, Kp // tk)

    itemsize_in = jnp.dtype(compute_dtype).itemsize
    cost = pl.CostEstimate(
        flops=2 * Bp * Kp * Np,
        transcendentals=0,
        bytes_accessed=(
            Bp * Kp * itemsize_in          # x stream
            + Kp * Np * itemsize_in        # W stream (dominant)
            + Np * 4                       # bias
            + Bp * Np * x.dtype.itemsize   # output writeback
        ),
    )

    out_padded = pl.pallas_call(
        linear_kernel,
        out_shape=jax.ShapeDtypeStruct((Bp, Np), x.dtype),
        grid_spec=pltpu.PrefetchScalarGridSpec(
            num_scalar_prefetch=0,
            grid=grid,
            in_specs=[
                pl.BlockSpec((tm, tk), lambda i, j, k: (i, k)),   # x tile
                pl.BlockSpec((tk, tn), lambda i, j, k: (k, j)),   # W tile
                pl.BlockSpec((1, tn), lambda i, j, k: (0, j)),    # bias tile
            ],
            out_specs=pl.BlockSpec((tm, tn), lambda i, j, k: (i, j)),
            scratch_shapes=[pltpu.VMEM((tm, tn), jnp.float32)],
        ),
        compiler_params=pltpu.CompilerParams(
            dimension_semantics=("parallel", "parallel", "arbitrary"),
            vmem_limit_bytes=64 * 1024 * 1024,
        ),
        cost_estimate=cost,
    )(xp, wp, bp)

    return out_padded[:B, :D_out]


if __name__ == "__main__":
    # Small shapes consistent with SimpleModel(input_dim, output_dim)
    batch, input_dim, output_dim = 8, 32, 16

    key = jax.random.PRNGKey(0)
    kx, kw, kb = jax.random.split(key, 3)

    x = jax.random.normal(kx, (batch, input_dim), dtype=jnp.float32)
    # "Linear" params stored pre-transposed: W (D_in, D_out), b (D_out,)
    w = jax.random.normal(kw, (input_dim, output_dim), dtype=jnp.float32) * 0.1
    b = jax.random.normal(kb, (output_dim,), dtype=jnp.float32) * 0.1

    y = simple_model_forward(x, w, b)
    jax.block_until_ready(y)

    # Reference 1: same bf16-input / f32-accumulate math (tight tolerance).
    y_ref_bf16 = (
        jnp.dot(
            x.astype(jnp.bfloat16),
            w.astype(jnp.bfloat16),
            preferred_element_type=jnp.float32,
        )
        + b[None, :]
    )
    assert jnp.allclose(y, y_ref_bf16, atol=1e-3, rtol=1e-3), "mismatch vs bf16 ref"

    # Reference 2: full-f32 torch.nn.Linear math (loose tolerance for bf16 cast).
    y_ref_f32 = x @ w + b[None, :]
    assert jnp.allclose(y, y_ref_f32, atol=2e-2, rtol=2e-2), "mismatch vs f32 ref"

    print("KERNEL_OK")
</pallas_src>

<mosaic_0001>
module attributes {stable_mosaic.version = 11 : i64} {
  func.func @linear_kernel(%arg0: i32, %arg1: i32, %arg2: i32, %arg3: memref<128x256xbf16, #tpu.memory_space<vmem>>, %arg4: memref<256x128xbf16, #tpu.memory_space<vmem>>, %arg5: memref<1x128xf32, #tpu.memory_space<vmem>>, %arg6: memref<128x128xf32, #tpu.memory_space<vmem>>, %arg7: memref<128x128xf32, #tpu.memory_space<vmem>>) attributes {dimension_semantics = [#tpu.dimension_semantics<parallel>, #tpu.dimension_semantics<parallel>, #tpu.dimension_semantics<arbitrary>], iteration_bounds = array<i64: 1, 1, 1>, scalar_prefetch = 0 : i64, scratch_operands = 1 : i64, tpu.core_type = #tpu.core_type<tc>, window_params = [{transform_indices = @transform_0, window_bounds = array<i64: 128, 256>}, {transform_indices = @transform_1, window_bounds = array<i64: 256, 128>}, {transform_indices = @transform_2, window_bounds = array<i64: 1, 128>}, {transform_indices = @transform_3, window_bounds = array<i64: 128, 128>}]} {
    %c0_i32 = arith.constant 0 : i32
    %0 = arith.cmpi eq, %arg2, %c0_i32 : i32
    %1 = arith.extui %0 : i1 to i32
    %c0_i32_0 = arith.constant 0 : i32
    %2 = arith.cmpi ne, %1, %c0_i32_0 : i32
    scf.if %2 {
      %cst_10 = arith.constant 0.000000e+00 : f32
      %12 = vector.broadcast %cst_10 : f32 to vector<128x128xf32>
      %c0_11 = arith.constant 0 : index
      %c0_12 = arith.constant 0 : index
      %13 = vector.load %arg7[%c0_11, %c0_12] : memref<128x128xf32, #tpu.memory_space<vmem>>, vector<128x128xf32>
      tpu.vector_store %arg7[%c0_11, %c0_12], %12 {strides = array<i32>} : memref<128x128xf32, #tpu.memory_space<vmem>>, vector<128x128xf32>,
    } else {
    }
    %c0 = arith.constant 0 : index
    %c0_1 = arith.constant 0 : index
    %3 = vector.load %arg7[%c0, %c0_1] : memref<128x128xf32, #tpu.memory_space<vmem>>, vector<128x128xf32>
    %c0_2 = arith.constant 0 : index
    %c0_3 = arith.constant 0 : index
    %4 = vector.load %arg3[%c0_2, %c0_3] : memref<128x256xbf16, #tpu.memory_space<vmem>>, vector<128x256xbf16>
    %c0_4 = arith.constant 0 : index
    %c0_5 = arith.constant 0 : index
    %5 = vector.load %arg4[%c0_4, %c0_5] : memref<256x128xbf16, #tpu.memory_space<vmem>>, vector<256x128xbf16>
    %cst = arith.constant dense<0.000000e+00> : vector<128x128xf32>
    %6 = tpu.matmul %4, %5, %cst {dimension_numbers = #tpu.dot_dimension_numbers<[1], [0], [0], [1], [0, 0, 1, 1], [], []>} : vector<128x256xbf16>, vector<256x128xbf16>, vector<128x128xf32> -> vector<128x128xf32>
    %7 = arith.addf %3, %6 : vector<128x128xf32>
    %c0_6 = arith.constant 0 : index
    %c0_7 = arith.constant 0 : index
    %8 = vector.load %arg7[%c0_6, %c0_7] : memref<128x128xf32, #tpu.memory_space<vmem>>, vector<128x128xf32>
    tpu.vector_store %arg7[%c0_6, %c0_7], %7 {strides = array<i32>} : memref<128x128xf32, #tpu.memory_space<vmem>>, vector<128x128xf32>,
    %c0_i32_8 = arith.constant 0 : i32
    %9 = arith.cmpi eq, %arg2, %c0_i32_8 : i32
    %10 = arith.extui %9 : i1 to i32
    %c0_i32_9 = arith.constant 0 : i32
    %11 = arith.cmpi ne, %10, %c0_i32_9 : i32
    scf.if %11 {
      %c0_10 = arith.constant 0 : index
      %c0_11 = arith.constant 0 : index
      %12 = vector.load %arg7[%c0_10, %c0_11] : memref<128x128xf32, #tpu.memory_space<vmem>>, vector<128x128xf32>
      %c0_12 = arith.constant 0 : index
      %c0_13 = arith.constant 0 : index
      %13 = vector.load %arg5[%c0_12, %c0_13] : memref<1x128xf32, #tpu.memory_space<vmem>>, vector<1x128xf32>
      %14 = vector.broadcast %13 : vector<1x128xf32> to vector<128x128xf32>
      %15 = arith.addf %12, %14 : vector<128x128xf32>
      %c0_14 = arith.constant 0 : index
      %c0_15 = arith.constant 0 : index
      %16 = vector.load %arg6[%c0_14, %c0_15] : memref<128x128xf32, #tpu.memory_space<vmem>>, vector<128x128xf32>
      tpu.vector_store %arg6[%c0_14, %c0_15], %15 {strides = array<i32>} : memref<128x128xf32, #tpu.memory_space<vmem>>, vector<128x128xf32>,
    } else {
    }
    return
  }
  func.func @transform_0(%arg0: i32, %arg1: i32, %arg2: i32) -> (i32, i32) {
    %c0_i32 = arith.constant 0 : i32
    return %arg0, %arg2 : i32, i32
  }
  func.func @transform_1(%arg0: i32, %arg1: i32, %arg2: i32) -> (i32, i32) {
    %c0_i32 = arith.constant 0 : i32
    return %arg2, %arg1 : i32, i32
  }
  func.func @transform_2(%arg0: i32, %arg1: i32, %arg2: i32) -> (i32, i32) {
    %c0_i32 = arith.constant 0 : i32
    %c0_i32_0 = arith.constant 0 : i32
    return %c0_i32, %arg1 : i32, i32
  }
  func.func @transform_3(%arg0: i32, %arg1: i32, %arg2: i32) -> (i32, i32) {
    %c0_i32 = arith.constant 0 : i32
    return %arg0, %arg1 : i32, i32
  }
}

</mosaic_0001>

<llo_original>
// kernel: simple_model_forward.1
$region0: #{simple_model_forward.1}
  #allocation0 [shape = 'u32[]', space=smem, size = 0x4, offset = 0x4, fixed_abs, tag = 'smem constant byte address 0x4 - core index']
  #allocation1 [shape = 'u32[72,128]{1,0:T(1,128)}', space=vmem, size = 0x9000, scoped, tag = 'internal scratch']
  #allocation2 [shape = 'f32[128,128]{1,0:T(8,128)}', space=vmem, size = 0x10000, scoped, tag = 'scratch operand']
  %s0 = inlined_call_operand.vmem [shape: bf16[128,256], index: 0, kind: input, shape index: {}]
  %s1 = inlined_call_operand.vmem [shape: bf16[256,128], index: 1, kind: input, shape index: {}]
  %s2 = inlined_call_operand.vmem [shape: f32[1,128], index: 2, kind: input, shape index: {}]
  %s3 = inlined_call_operand.vmem [shape: f32[128,128], index: 3, kind: output, shape index: {}]
  %s4 = sld [smem:[#allocation0]]
  $region30: #{simple_model_forward.1} parent=0
    _
  %s6 = ssub.s32 1, %s4
  %s7 = scalar_select 0, %s6, %s4
  // Predicated region
  $region2: #{simple_model_forward.1} parent=0 // pred_check
    _
  $region3: #{simple_model_forward.1} parent=0 // pred_check_branch
    %9 = sbr.rel (0) target = $region5
  $region4: #{simple_model_forward.1} parent=0 // pred_region
    _
  $region5: #{simple_model_forward.1} parent=0 // pred_fallthru
    _
  // Predicated region
  $region6: #{simple_model_forward.1} parent=0 // pred_check
    _
  $region7: #{simple_model_forward.1} parent=0 // pred_check_branch
    %11 = sbr.rel (0) target = $region9
  $region8: #{simple_model_forward.1} parent=0 // pred_region
    _
  $region9: #{simple_model_forward.1} parent=0 // pred_fallthru
    _
  // Predicated region
  $region10: #{simple_model_forward.1} parent=0 // pred_check
    _
  $region11: #{simple_model_forward.1} parent=0 // pred_check_branch
    %13 = sbr.rel (0) target = $region13
  $region12: #{simple_model_forward.1} parent=0 // pred_region
    _
  $region13: #{simple_model_forward.1} parent=0 // pred_fallthru
    _
  %p14 = scmp.eq.s32.totalorder 0, 0
  // Predicated region
  $region14: #{simple_model_forward.1} parent=0 // pred_check
    %p15 = pneg %p14
  $region15: #{simple_model_forward.1} parent=0 // pred_check_branch
    %17 = sbr.rel (%p15) target = $region17
  $region16: #{simple_model_forward.1} parent=0 // pred_region
    %18 = vst [vmem:[#allocation2] sm:$0xff] 0.0
    %19 = vst [vmem:[#allocation2 + $0x8] sm:$0xff] 0.0
    %20 = vst [vmem:[#allocation2 + $0x10] sm:$0xff] 0.0
    %21 = vst [vmem:[#allocation2 + $0x18] sm:$0xff] 0.0
    %22 = vst [vmem:[#allocation2 + $0x20] sm:$0xff] 0.0
    %23 = vst [vmem:[#allocation2 + $0x28] sm:$0xff] 0.0
    %24 = vst [vmem:[#allocation2 + $0x30] sm:$0xff] 0.0
    %25 = vst [vmem:[#allocation2 + $0x38] sm:$0xff] 0.0
    %26 = vst [vmem:[#allocation2 + $0x40] sm:$0xff] 0.0
    %27 = vst [vmem:[#allocation2 + $0x48] sm:$0xff] 0.0
    %28 = vst [vmem:[#allocation2 + $0x50] sm:$0xff] 0.0
    %29 = vst [vmem:[#allocation2 + $0x58] sm:$0xff] 0.0
    %30 = vst [vmem:[#allocation2 + $0x60] sm:$0xff] 0.0
    %31 = vst [vmem:[#allocation2 + $0x68] sm:$0xff] 0.0
    %32 = vst [vmem:[#allocation2 + $0x70] sm:$0xff] 0.0
    %33 = vst [vmem:[#allocation2 + $0x78] sm:$0xff] 0.0
  $region17: #{simple_model_forward.1} parent=0 // pred_fallthru
    _
  %v34 = vld [vmem:[#allocation2] sm:$0xff]
  %v35 = vld [vmem:[#allocation2 + $0x8] sm:$0xff]
  %v36 = vld [vmem:[#allocation2 + $0x10] sm:$0xff]
  %v37 = vld [vmem:[#allocation2 + $0x18] sm:$0xff]
  %v38 = vld [vmem:[#allocation2 + $0x20] sm:$0xff]
  %v39 = vld [vmem:[#allocation2 + $0x28] sm:$0xff]
  %v40 = vld [vmem:[#allocation2 + $0x30] sm:$0xff]
  %v41 = vld [vmem:[#allocation2 + $0x38] sm:$0xff]
  %v42 = vld [vmem:[#allocation2 + $0x40] sm:$0xff]
  %v43 = vld [vmem:[#allocation2 + $0x48] sm:$0xff]
  %v44 = vld [vmem:[#allocation2 + $0x50] sm:$0xff]
  %v45 = vld [vmem:[#allocation2 + $0x58] sm:$0xff]
  %v46 = vld [vmem:[#allocation2 + $0x60] sm:$0xff]
  %v47 = vld [vmem:[#allocation2 + $0x68] sm:$0xff]
  %v48 = vld [vmem:[#allocation2 + $0x70] sm:$0xff]
  %v49 = vld [vmem:[#allocation2 + $0x78] sm:$0xff]
  %v50 = vld [vmem:[%s0] sm:$0xff]
  %v51 = vld [vmem:[%s0 + $0x8] sm:$0xff]
  %v52 = vld [vmem:[%s0 + $0x10] sm:$0xff]
  %v53 = vld [vmem:[%s0 + $0x18] sm:$0xff]
  %v54 = vld [vmem:[%s0 + $0x20] sm:$0xff]
  %v55 = vld [vmem:[%s0 + $0x28] sm:$0xff]
  %v56 = vld [vmem:[%s0 + $0x30] sm:$0xff]
  %v57 = vld [vmem:[%s0 + $0x38] sm:$0xff]
  %v58 = vld [vmem:[%s0 + $0x40] sm:$0xff]
  %v59 = vld [vmem:[%s0 + $0x48] sm:$0xff]
  %v60 = vld [vmem:[%s0 + $0x50] sm:$0xff]
  %v61 = vld [vmem:[%s0 + $0x58] sm:$0xff]
  %v62 = vld [vmem:[%s0 + $0x60] sm:$0xff]
  %v63 = vld [vmem:[%s0 + $0x68] sm:$0xff]
  %v64 = vld [vmem:[%s0 + $0x70] sm:$0xff]
  %v65 = vld [vmem:[%s0 + $0x78] sm:$0xff]
  %v66 = vld [vmem:[%s1] sm:$0xf]
  %v67 = vld [vmem:[%s1 + $0x4] sm:$0xf]
  %v68 = vld [vmem:[%s1 + $0x8] sm:$0xf]
  %v69 = vld [vmem:[%s1 + $0xc] sm:$0xf]
  %v70 = vld [vmem:[%s1 + $0x10] sm:$0xf]
  %v71 = vld [vmem:[%s1 + $0x14] sm:$0xf]
  %v72 = vld [vmem:[%s1 + $0x18] sm:$0xf]
  %v73 = vld [vmem:[%s1 + $0x1c] sm:$0xf]
  %v74 = vld [vmem:[%s1 + $0x20] sm:$0xf]
  %v75 = vld [vmem:[%s1 + $0x24] sm:$0xf]
  %v76 = vld [vmem:[%s1 + $0x28] sm:$0xf]
  %v77 = vld [vmem:[%s1 + $0x2c] sm:$0xf]
  %v78 = vld [vmem:[%s1 + $0x30] sm:$0xf]
  %v79 = vld [vmem:[%s1 + $0x34] sm:$0xf]
  %v80 = vld [vmem:[%s1 + $0x38] sm:$0xf]
  %v81 = vld [vmem:[%s1 + $0x3c] sm:$0xf]
  %v82 = vld [vmem:[%s1 + $0x40] sm:$0xf]
  %v83 = vld [vmem:[%s1 + $0x44] sm:$0xf]
  %v84 = vld [vmem:[%s1 + $0x48] sm:$0xf]
  %v85 = vld [vmem:[%s1 + $0x4c] sm:$0xf]
  %v86 = vld [vmem:[%s1 + $0x50] sm:$0xf]
  %v87 = vld [vmem:[%s1 + $0x54] sm:$0xf]
  %v88 = vld [vmem:[%s1 + $0x58] sm:$0xf]
  %v89 = vld [vmem:[%s1 + $0x5c] sm:$0xf]
  %v90 = vld [vmem:[%s1 + $0x60] sm:$0xf]
  %v91 = vld [vmem:[%s1 + $0x64] sm:$0xf]
  %v92 = vld [vmem:[%s1 + $0x68] sm:$0xf]
  %v93 = vld [vmem:[%s1 + $0x6c] sm:$0xf]
  %v94 = vld [vmem:[%s1 + $0x70] sm:$0xf]
  %v95 = vld [vmem:[%s1 + $0x74] sm:$0xf]
  %v96 = vld [vmem:[%s1 + $0x78] sm:$0xf]
  %v97 = vld [vmem:[%s1 + $0x7c] sm:$0xf]
  %v114 = vunpack.c.l.b16 %v50
  %v115 = vunpack.c.h.b16 %v50
  %v116 = vunpack.c.l.b16 %v51
  %v117 = vunpack.c.h.b16 %v51
  %v118 = vunpack.c.l.b16 %v52
  %v119 = vunpack.c.h.b16 %v52
  %v120 = vunpack.c.l.b16 %v53
  %v121 = vunpack.c.h.b16 %v53
  %v122 = vunpack.c.l.b16 %v54
  %v123 = vunpack.c.h.b16 %v54
  %v124 = vunpack.c.l.b16 %v55
  %v125 = vunpack.c.h.b16 %v55
  %v126 = vunpack.c.l.b16 %v56
  %v127 = vunpack.c.h.b16 %v56
  %v128 = vunpack.c.l.b16 %v57
  %v129 = vunpack.c.h.b16 %v57
  %v130 = vunpack.c.l.b16 %v58
  %v131 = vunpack.c.h.b16 %v58
  %v132 = vunpack.c.l.b16 %v59
  %v133 = vunpack.c.h.b16 %v59
  %v134 = vunpack.c.l.b16 %v60
  %v135 = vunpack.c.h.b16 %v60
  %v136 = vunpack.c.l.b16 %v61
  %v137 = vunpack.c.h.b16 %v61
  %v138 = vunpack.c.l.b16 %v62
  %v139 = vunpack.c.h.b16 %v62
  %v140 = vunpack.c.l.b16 %v63
  %v141 = vunpack.c.h.b16 %v63
  %v142 = vunpack.c.l.b16 %v64
  %v143 = vunpack.c.h.b16 %v64
  %v144 = vunpack.c.l.b16 %v65
  %v145 = vunpack.c.h.b16 %v65
  %v146 = vpack.c.b16 %v116, %v114
  %v147 = vpack.c.b16 %v117, %v115
  %v148 = vpack.c.b16 %v120, %v118
  %v149 = vpack.c.b16 %v121, %v119
  %v150 = vpack.c.b16 %v124, %v122
  %v151 = vpack.c.b16 %v125, %v123
  %v152 = vpack.c.b16 %v128, %v126
  %v153 = vpack.c.b16 %v129, %v127
  %v154 = vpack.c.b16 %v132, %v130
  %v155 = vpack.c.b16 %v133, %v131
  %v156 = vpack.c.b16 %v136, %v134
  %v157 = vpack.c.b16 %v137, %v135
  %v158 = vpack.c.b16 %v140, %v138
  %v159 = vpack.c.b16 %v141, %v139
  %v160 = vpack.c.b16 %v144, %v142
  %v161 = vpack.c.b16 %v145, %v143
  %v210 = vunpack.c.l.b16 %v66
  %v211 = vunpack.c.l.b16 %v67
  %v212 = vunpack.c.l.b16 %v68
  %v213 = vunpack.c.l.b16 %v69
  %v214 = vunpack.c.l.b16 %v70
  %v215 = vunpack.c.l.b16 %v71
  %v216 = vunpack.c.l.b16 %v72
  %v217 = vunpack.c.l.b16 %v73
  %v218 = vunpack.c.l.b16 %v74
  %v219 = vunpack.c.l.b16 %v75
  %v220 = vunpack.c.l.b16 %v76
  %v221 = vunpack.c.l.b16 %v77
  %v222 = vunpack.c.l.b16 %v78
  %v223 = vunpack.c.l.b16 %v79
  %v224 = vunpack.c.l.b16 %v80
  %v225 = vunpack.c.l.b16 %v81
  %v226 = vunpack.c.l.b16 %v82
  %v227 = vunpack.c.l.b16 %v83
  %v228 = vunpack.c.l.b16 %v84
  %v229 = vunpack.c.l.b16 %v85
  %v230 = vunpack.c.l.b16 %v86
  %v231 = vunpack.c.l.b16 %v87
  %v232 = vunpack.c.l.b16 %v88
  %v233 = vunpack.c.l.b16 %v89
  %v234 = vunpack.c.l.b16 %v90
  %v235 = vunpack.c.l.b16 %v91
  %v236 = vunpack.c.l.b16 %v92
  %v237 = vunpack.c.l.b16 %v93
  %v238 = vunpack.c.l.b16 %v94
  %v239 = vunpack.c.l.b16 %v95
  %v240 = vunpack.c.l.b16 %v96
  %v241 = vunpack.c.l.b16 %v97
  %v242 = vpack.c.b16 %v211, %v210
  %v243 = vpack.c.b16 %v213, %v212
  %v244 = vpack.c.b16 %v215, %v214
  %v245 = vpack.c.b16 %v217, %v216
  %v246 = vpack.c.b16 %v219, %v218
  %v247 = vpack.c.b16 %v221, %v220
  %v248 = vpack.c.b16 %v223, %v222
  %v249 = vpack.c.b16 %v225, %v224
  %v250 = vpack.c.b16 %v227, %v226
  %v251 = vpack.c.b16 %v229, %v228
  %v252 = vpack.c.b16 %v231, %v230
  %v253 = vpack.c.b16 %v233, %v232
  %v254 = vpack.c.b16 %v235, %v234
  %v255 = vpack.c.b16 %v237, %v236
  %v256 = vpack.c.b16 %v239, %v238
  %v257 = vpack.c.b16 %v241, %v240
  %274 = vmatpush.bf16.msra.mxu0 %v249
  %275 = vmatpush.bf16.msra.mxu0 %v248
  %276 = vmatpush.bf16.msra.mxu0 %v247
  %277 = vmatpush.bf16.msra.mxu0 %v246
  %278 = vmatpush.bf16.msra.mxu0 %v245
  %279 = vmatpush.bf16.msra.mxu0 %v244
  %280 = vmatpush.bf16.msra.mxu0 %v243
  %281 = vmatpush.bf16.msra.mxu0 %v242
  %282 = vmatmul.bf16.gmra.mxu0 %v146
  %v283 = vpop.f32.mrf.mxu0
  %v284 = vadd.f32 0.0, %v283
  %v285 = vpop.f32.mrf.mxu0
  %v286 = vadd.f32 0.0, %v285
  %287 = vmatmul.bf16.gmra.mxu0 %v148
  %v288 = vpop.f32.mrf.mxu0
  %v289 = vadd.f32 0.0, %v288
  %v290 = vpop.f32.mrf.mxu0
  %v291 = vadd.f32 0.0, %v290
  %292 = vmatmul.bf16.gmra.mxu0 %v150
  %v293 = vpop.f32.mrf.mxu0
  %v294 = vadd.f32 0.0, %v293
  %v295 = vpop.f32.mrf.mxu0
  %v296 = vadd.f32 0.0, %v295
  %297 = vmatmul.bf16.gmra.mxu0 %v152
  %v298 = vpop.f32.mrf.mxu0
  %v299 = vadd.f32 0.0, %v298
  %v300 = vpop.f32.mrf.mxu0
  %v301 = vadd.f32 0.0, %v300
  %302 = vmatmul.bf16.gmra.mxu0 %v154
  %v303 = vpop.f32.mrf.mxu0
  %v304 = vadd.f32 0.0, %v303
  %v305 = vpop.f32.mrf.mxu0
  %v306 = vadd.f32 0.0, %v305
  %307 = vmatmul.bf16.gmra.mxu0 %v156
  %v308 = vpop.f32.mrf.mxu0
  %v309 = vadd.f32 0.0, %v308
  %v310 = vpop.f32.mrf.mxu0
  %v311 = vadd.f32 0.0, %v310
  %312 = vmatmul.bf16.gmra.mxu0 %v158
  %v313 = vpop.f32.mrf.mxu0
  %v314 = vadd.f32 0.0, %v313
  %v315 = vpop.f32.mrf.mxu0
  %v316 = vadd.f32 0.0, %v315
  %317 = vmatmul.bf16.gmra.mxu0 %v160
  %v318 = vpop.f32.mrf.mxu0
  %v319 = vadd.f32 0.0, %v318
  %v320 = vpop.f32.mrf.mxu0
  %v321 = vadd.f32 0.0, %v320
  %322 = vdwg.mxu0
  %323 = vmatpush.bf16.msra.mxu0 %v257
  %324 = vmatpush.bf16.msra.mxu0 %v256
  %325 = vmatpush.bf16.msra.mxu0 %v255
  %326 = vmatpush.bf16.msra.mxu0 %v254
  %327 = vmatpush.bf16.msra.mxu0 %v253
  %328 = vmatpush.bf16.msra.mxu0 %v252
  %329 = vmatpush.bf16.msra.mxu0 %v251
  %330 = vmatpush.bf16.msra.mxu0 %v250
  %331 = vmatmul.bf16.gmra.mxu0 %v147
  %v332 = vpop.f32.mrf.mxu0
  %v333 = vadd.f32 %v284, %v332
  %v334 = vpop.f32.mrf.mxu0
  %v335 = vadd.f32 %v286, %v334
  %336 = vmatmul.bf16.gmra.mxu0 %v149
  %v337 = vpop.f32.mrf.mxu0
  %v338 = vadd.f32 %v289, %v337
  %v339 = vpop.f32.mrf.mxu0
  %v340 = vadd.f32 %v291, %v339
  %341 = vmatmul.bf16.gmra.mxu0 %v151
  %v342 = vpop.f32.mrf.mxu0
  %v343 = vadd.f32 %v294, %v342
  %v344 = vpop.f32.mrf.mxu0
  %v345 = vadd.f32 %v296, %v344
  %346 = vmatmul.bf16.gmra.mxu0 %v153
  %v347 = vpop.f32.mrf.mxu0
  %v348 = vadd.f32 %v299, %v347
  %v349 = vpop.f32.mrf.mxu0
  %v350 = vadd.f32 %v301, %v349
  %351 = vmatmul.bf16.gmra.mxu0 %v155
  %v352 = vpop.f32.mrf.mxu0
  %v353 = vadd.f32 %v304, %v352
  %v354 = vpop.f32.mrf.mxu0
  %v355 = vadd.f32 %v306, %v354
  %356 = vmatmul.bf16.gmra.mxu0 %v157
  %v357 = vpop.f32.mrf.mxu0
  %v358 = vadd.f32 %v309, %v357
  %v359 = vpop.f32.mrf.mxu0
  %v360 = vadd.f32 %v311, %v359
  %361 = vmatmul.bf16.gmra.mxu0 %v159
  %v362 = vpop.f32.mrf.mxu0
  %v363 = vadd.f32 %v314, %v362
  %v364 = vpop.f32.mrf.mxu0
  %v365 = vadd.f32 %v316, %v364
  %366 = vmatmul.bf16.gmra.mxu0 %v161
  %v367 = vpop.f32.mrf.mxu0
  %v368 = vadd.f32 %v319, %v367
  %v369 = vpop.f32.mrf.mxu0
  %v370 = vadd.f32 %v321, %v369
  %371 = vdwg.mxu0
  %v372 = vadd.f32 %v34, %v333
  %v373 = vadd.f32 %v35, %v335
  %v374 = vadd.f32 %v36, %v338
  %v375 = vadd.f32 %v37, %v340
  %v376 = vadd.f32 %v38, %v343
  %v377 = vadd.f32 %v39, %v345
  %v378 = vadd.f32 %v40, %v348
  %v379 = vadd.f32 %v41, %v350
  %v380 = vadd.f32 %v42, %v353
  %v381 = vadd.f32 %v43, %v355
  %v382 = vadd.f32 %v44, %v358
  %v383 = vadd.f32 %v45, %v360
  %v384 = vadd.f32 %v46, %v363
  %v385 = vadd.f32 %v47, %v365
  %v386 = vadd.f32 %v48, %v368
  %v387 = vadd.f32 %v49, %v370
  %388 = vst [vmem:[#allocation2] sm:$0xff] %v372
  %389 = vst [vmem:[#allocation2 + $0x8] sm:$0xff] %v373
  %390 = vst [vmem:[#allocation2 + $0x10] sm:$0xff] %v374
  %391 = vst [vmem:[#allocation2 + $0x18] sm:$0xff] %v375
  %392 = vst [vmem:[#allocation2 + $0x20] sm:$0xff] %v376
  %393 = vst [vmem:[#allocation2 + $0x28] sm:$0xff] %v377
  %394 = vst [vmem:[#allocation2 + $0x30] sm:$0xff] %v378
  %395 = vst [vmem:[#allocation2 + $0x38] sm:$0xff] %v379
  %396 = vst [vmem:[#allocation2 + $0x40] sm:$0xff] %v380
  %397 = vst [vmem:[#allocation2 + $0x48] sm:$0xff] %v381
  %398 = vst [vmem:[#allocation2 + $0x50] sm:$0xff] %v382
  %399 = vst [vmem:[#allocation2 + $0x58] sm:$0xff] %v383
  %400 = vst [vmem:[#allocation2 + $0x60] sm:$0xff] %v384
  %401 = vst [vmem:[#allocation2 + $0x68] sm:$0xff] %v385
  %402 = vst [vmem:[#allocation2 + $0x70] sm:$0xff] %v386
  %403 = vst [vmem:[#allocation2 + $0x78] sm:$0xff] %v387
  // Predicated region
  $region18: #{simple_model_forward.1} parent=0 // pred_check
    %p404 = pneg %p14
  $region19: #{simple_model_forward.1} parent=0 // pred_check_branch
    %406 = sbr.rel (%p404) target = $region21
  $region20: #{simple_model_forward.1} parent=0 // pred_region
    %v407 = vld [vmem:[#allocation2] sm:$0xff]
    %v408 = vld [vmem:[#allocation2 + $0x8] sm:$0xff]
    %v409 = vld [vmem:[#allocation2 + $0x10] sm:$0xff]
    %v410 = vld [vmem:[#allocation2 + $0x18] sm:$0xff]
    %v411 = vld [vmem:[#allocation2 + $0x20] sm:$0xff]
    %v412 = vld [vmem:[#allocation2 + $0x28] sm:$0xff]
    %v413 = vld [vmem:[#allocation2 + $0x30] sm:$0xff]
    %v414 = vld [vmem:[#allocation2 + $0x38] sm:$0xff]
    %v415 = vld [vmem:[#allocation2 + $0x40] sm:$0xff]
    %v416 = vld [vmem:[#allocation2 + $0x48] sm:$0xff]
    %v417 = vld [vmem:[#allocation2 + $0x50] sm:$0xff]
    %v418 = vld [vmem:[#allocation2 + $0x58] sm:$0xff]
    %v419 = vld [vmem:[#allocation2 + $0x60] sm:$0xff]
    %v420 = vld [vmem:[#allocation2 + $0x68] sm:$0xff]
    %v421 = vld [vmem:[#allocation2 + $0x70] sm:$0xff]
    %v422 = vld [vmem:[#allocation2 + $0x78] sm:$0xff]
    %v423 = vld [vmem:[%s2] sm:$0x1]
    %v425 = vperm.slane %v423, 0
    %v427 = vadd.f32 %v407, %v425
    %v428 = vadd.f32 %v408, %v425
    %v429 = vadd.f32 %v409, %v425
    %v430 = vadd.f32 %v410, %v425
    %v431 = vadd.f32 %v411, %v425
    %v432 = vadd.f32 %v412, %v425
    %v433 = vadd.f32 %v413, %v425
    %v434 = vadd.f32 %v414, %v425
    %v435 = vadd.f32 %v415, %v425
    %v436 = vadd.f32 %v416, %v425
    %v437 = vadd.f32 %v417, %v425
    %v438 = vadd.f32 %v418, %v425
    %v439 = vadd.f32 %v419, %v425
    %v440 = vadd.f32 %v420, %v425
    %v441 = vadd.f32 %v421, %v425
    %v442 = vadd.f32 %v422, %v425
    %443 = vst [vmem:[%s3] sm:$0xff] %v427
    %444 = vst [vmem:[%s3 + $0x8] sm:$0xff] %v428
    %445 = vst [vmem:[%s3 + $0x10] sm:$0xff] %v429
    %446 = vst [vmem:[%s3 + $0x18] sm:$0xff] %v430
    %447 = vst [vmem:[%s3 + $0x20] sm:$0xff] %v431
    %448 = vst [vmem:[%s3 + $0x28] sm:$0xff] %v432
    %449 = vst [vmem:[%s3 + $0x30] sm:$0xff] %v433
    %450 = vst [vmem:[%s3 + $0x38] sm:$0xff] %v434
    %451 = vst [vmem:[%s3 + $0x40] sm:$0xff] %v435
    %452 = vst [vmem:[%s3 + $0x48] sm:$0xff] %v436
    %453 = vst [vmem:[%s3 + $0x50] sm:$0xff] %v437
    %454 = vst [vmem:[%s3 + $0x58] sm:$0xff] %v438
    %455 = vst [vmem:[%s3 + $0x60] sm:$0xff] %v439
    %456 = vst [vmem:[%s3 + $0x68] sm:$0xff] %v440
    %457 = vst [vmem:[%s3 + $0x70] sm:$0xff] %v441
    %458 = vst [vmem:[%s3 + $0x78] sm:$0xff] %v442
  $region21: #{simple_model_forward.1} parent=0 // pred_fallthru
    _
  // Predicated region
  $region22: #{simple_model_forward.1} parent=0 // pred_check
    _
  $region23: #{simple_model_forward.1} parent=0 // pred_check_branch
    %460 = sbr.rel (0) target = $region25
  $region24: #{simple_model_forward.1} parent=0 // pred_region
    _
  $region25: #{simple_model_forward.1} parent=0 // pred_fallthru
    _
  // Predicated region
  $region26: #{simple_model_forward.1} parent=0 // pred_check
    _
  $region27: #{simple_model_forward.1} parent=0 // pred_check_branch
    %462 = sbr.rel (0) target = $region29
  $region28: #{simple_model_forward.1} parent=0 // pred_region
    _
  $region29: #{simple_model_forward.1} parent=0 // pred_fallthru
    _

</llo_original>
